<compile_context>
chip_gen: v6e
topology: v6e:2x2x1
jax: 0.10.0
libtpu: 0.0.40
codegen_flags: <defaults>
</compile_context>

<pallas_src>
import jax
import jax.numpy as jnp
from jax.experimental import pallas as pl
from jax.experimental.pallas import tpu as pltpu

NUM_LAYERS = 9      # input feature dim (nn.Linear(num_layers, 128))
HIDDEN = 128
OUT = 5
OUT_PAD = 8         # head N padded 5 -> 8 (narrow, still legal block last-dim)
NEG_SLOPE = 0.01    # nn.LeakyReLU() default


def _cdiv(a, b):
    return (a + b - 1) // b


def _round_up(n, m):
    return ((n + m - 1) // m) * m


def _leaky_relu(v):
    # 0 < slope < 1  =>  leaky_relu(v) == max(v, slope*v)
    return jnp.maximum(v, NEG_SLOPE * v)


def _layer(h, w_ref, b_ref, out_dtype):
    # MXU matmul in the weights' dtype (f32 or bf16), f32 accumulate,
    # bias-add + LeakyReLU in f32 on the VPU, then cast to out_dtype
    # (weight dtype between layers, f32 for the head).
    acc = jnp.dot(h, w_ref[...], preferred_element_type=jnp.float32)
    acc = acc + b_ref[...].astype(jnp.float32)
    return _leaky_relu(acc).astype(out_dtype)


def dql_kernel(x_ref, w1_ref, b1_ref, w2_ref, b2_ref, w3_ref, b3_ref,
               w4_ref, b4_ref, o_ref):
    wdt = w1_ref.dtype
    h = x_ref[...].astype(wdt)                  # (tb, 9)
    h = _layer(h, w1_ref, b1_ref, wdt)          # (tb, 128)
    h = _layer(h, w2_ref, b2_ref, wdt)          # (tb, 128)
    h = _layer(h, w3_ref, b3_ref, wdt)          # (tb, 128)
    h = _layer(h, w4_ref, b4_ref, jnp.float32)  # (tb, 8), activation on head too
    o_ref[...] = h.astype(o_ref.dtype)


def pad_params(params):
    """Pad only the ragged head columns: w4 (128,5)->(128,8), b4 (1,5)->(1,8)."""
    out = dict(params)
    out["w4"] = jnp.pad(params["w4"], ((0, 0), (0, OUT_PAD - OUT)))
    out["b4"] = jnp.pad(params["b4"], ((0, 0), (0, OUT_PAD - OUT)))
    return out


def _choose_tiles(B, block_b):
    """Pick a batch tile (multiple of 8) that splits the padded batch evenly
    and gives >=2 tiles when B > 64 so both v7x TensorCores get work."""
    b8 = _round_up(max(B, 8), 8)
    n_tiles = _cdiv(b8, block_b)
    if b8 > 64:
        n_tiles = max(n_tiles, 2)
    tb = _round_up(_cdiv(b8, n_tiles), 8)
    n_tiles = _cdiv(b8, tb)
    return tb, n_tiles, tb * n_tiles


def dql_forward(x, padded_params, *, block_b=2048):
    """x: (B, NUM_LAYERS); padded_params from pad_params(). Returns (B, OUT) f32."""
    B, F = x.shape
    assert F == NUM_LAYERS, F
    tb, n_tiles, b_pad = _choose_tiles(B, block_b)
    x_p = x if b_pad == B else jnp.pad(x, ((0, b_pad - B), (0, 0)))

    const = lambda i: (0, 0)                    # weights resident across all tiles
    pp = padded_params
    out = pl.pallas_call(
        dql_kernel,
        out_shape=jax.ShapeDtypeStruct((b_pad, OUT_PAD), jnp.float32),
        grid=(n_tiles,),
        in_specs=[
            pl.BlockSpec((tb, NUM_LAYERS), lambda i: (i, 0)),  # x: tiled over batch
            pl.BlockSpec((NUM_LAYERS, HIDDEN), const),         # w1 (9,128)
            pl.BlockSpec((1, HIDDEN), const),                  # b1
            pl.BlockSpec((HIDDEN, HIDDEN), const),             # w2
            pl.BlockSpec((1, HIDDEN), const),                  # b2
            pl.BlockSpec((HIDDEN, HIDDEN), const),             # w3
            pl.BlockSpec((1, HIDDEN), const),                  # b3
            pl.BlockSpec((HIDDEN, OUT_PAD), const),            # w4 (128,8)
            pl.BlockSpec((1, OUT_PAD), const),                 # b4 (1,8)
        ],
        out_specs=pl.BlockSpec((tb, OUT_PAD), lambda i: (i, 0)),
        compiler_params=pltpu.CompilerParams(
            dimension_semantics=("parallel",)),                # 2x on v7x megacore
    )(x_p,
      pp["w1"], pp["b1"], pp["w2"], pp["b2"],
      pp["w3"], pp["b3"], pp["w4"], pp["b4"])
    return out[:B, :OUT]


def init_params(key, dtype=jnp.float32):
    """PyTorch Linear default init (uniform +-1/sqrt(fan_in)), stored (in, out)."""
    dims = [(NUM_LAYERS, HIDDEN), (HIDDEN, HIDDEN), (HIDDEN, HIDDEN), (HIDDEN, OUT)]
    params = {}
    keys = jax.random.split(key, 2 * len(dims))
    for i, (fan_in, fan_out) in enumerate(dims):
        bound = 1.0 / jnp.sqrt(float(fan_in))
        params[f"w{i + 1}"] = jax.random.uniform(
            keys[2 * i], (fan_in, fan_out), jnp.float32, -bound, bound).astype(dtype)
        params[f"b{i + 1}"] = jax.random.uniform(
            keys[2 * i + 1], (1, fan_out), jnp.float32, -bound, bound).astype(dtype)
    return params


def dql_forward_ref(x, params):
    """Plain-JAX reference mirroring the kernel's dtype/accumulation structure."""
    wdt = params["w1"].dtype
    h = x.astype(wdt)
    for i in range(1, 5):
        w, b = params[f"w{i}"], params[f"b{i}"]
        acc = jnp.dot(h, w, preferred_element_type=jnp.float32)
        acc = acc + b.astype(jnp.float32)
        act = _leaky_relu(acc)
        h = act.astype(wdt) if i < 4 else act
    return h


# TODO(synk): only forward() is implemented; replay memory, Adam training step,
# epsilon-greedy game loop and plotting have no Pallas equivalent here.

if __name__ == "__main__":
    key = jax.random.PRNGKey(0)
    pkey, xkey1, xkey2 = jax.random.split(key, 3)

    params = init_params(pkey, jnp.float32)
    pparams = pad_params(params)

    # ---- f32, small batch (single grid tile) ----
    x_small = jax.random.normal(xkey1, (8, NUM_LAYERS), jnp.float32)
    out = jax.block_until_ready(dql_forward(x_small, pparams))
    ref = dql_forward_ref(x_small, params)
    assert out.shape == (8, OUT), out.shape
    # Loose-ish tolerance: Mosaic and XLA may use different f32 MXU pass counts.
    assert jnp.allclose(out, ref, atol=1e-2, rtol=1e-2), "f32 mismatch"

    # ---- bf16 operands, ragged batch -> 2 parallel tiles + row padding ----
    params_bf16 = {k: v.astype(jnp.bfloat16) for k, v in params.items()}
    pparams_bf16 = pad_params(params_bf16)
    x_big = jax.random.normal(xkey2, (200, NUM_LAYERS), jnp.float32).astype(jnp.bfloat16)
    out_bf16 = jax.block_until_ready(dql_forward(x_big, pparams_bf16))
    ref_bf16 = dql_forward_ref(x_big, params_bf16)
    assert out_bf16.shape == (200, OUT), out_bf16.shape
    assert jnp.allclose(out_bf16, ref_bf16, atol=5e-2, rtol=5e-2), "bf16 mismatch"

    print("KERNEL_OK")
</pallas_src>

<mosaic_0001>
module attributes {stable_mosaic.version = 11 : i64} {
  func.func @dql_kernel(%arg0: i32, %arg1: memref<8x9xf32, #tpu.memory_space<vmem>>, %arg2: memref<9x128xf32, #tpu.memory_space<vmem>>, %arg3: memref<1x128xf32, #tpu.memory_space<vmem>>, %arg4: memref<128x128xf32, #tpu.memory_space<vmem>>, %arg5: memref<1x128xf32, #tpu.memory_space<vmem>>, %arg6: memref<128x128xf32, #tpu.memory_space<vmem>>, %arg7: memref<1x128xf32, #tpu.memory_space<vmem>>, %arg8: memref<128x8xf32, #tpu.memory_space<vmem>>, %arg9: memref<1x8xf32, #tpu.memory_space<vmem>>, %arg10: memref<8x8xf32, #tpu.memory_space<vmem>>) attributes {dimension_semantics = [#tpu.dimension_semantics<parallel>], iteration_bounds = array<i64: 1>, scalar_prefetch = 0 : i64, scratch_operands = 0 : i64, tpu.core_type = #tpu.core_type<tc>, window_params = [{transform_indices = @transform_0, window_bounds = array<i64: 8, 9>}, {pipeline_mode = #tpu.pipeline_mode<synchronous>, transform_indices = @transform_1, window_bounds = array<i64: 9, 128>}, {pipeline_mode = #tpu.pipeline_mode<synchronous>, transform_indices = @transform_2, window_bounds = array<i64: 1, 128>}, {pipeline_mode = #tpu.pipeline_mode<synchronous>, transform_indices = @transform_3, window_bounds = array<i64: 128, 128>}, {pipeline_mode = #tpu.pipeline_mode<synchronous>, transform_indices = @transform_4, window_bounds = array<i64: 1, 128>}, {pipeline_mode = #tpu.pipeline_mode<synchronous>, transform_indices = @transform_5, window_bounds = array<i64: 128, 128>}, {pipeline_mode = #tpu.pipeline_mode<synchronous>, transform_indices = @transform_6, window_bounds = array<i64: 1, 128>}, {pipeline_mode = #tpu.pipeline_mode<synchronous>, transform_indices = @transform_7, window_bounds = array<i64: 128, 8>}, {pipeline_mode = #tpu.pipeline_mode<synchronous>, transform_indices = @transform_8, window_bounds = array<i64: 1, 8>}, {transform_indices = @transform_9, window_bounds = array<i64: 8, 8>}]} {
    %c0 = arith.constant 0 : index
    %c0_0 = arith.constant 0 : index
    %0 = vector.load %arg1[%c0, %c0_0] : memref<8x9xf32, #tpu.memory_space<vmem>>, vector<8x9xf32>
    %c0_1 = arith.constant 0 : index
    %c0_2 = arith.constant 0 : index
    %1 = vector.load %arg2[%c0_1, %c0_2] : memref<9x128xf32, #tpu.memory_space<vmem>>, vector<9x128xf32>
    %cst = arith.constant dense<0.000000e+00> : vector<8x128xf32>
    %2 = tpu.matmul %0, %1, %cst {dimension_numbers = #tpu.dot_dimension_numbers<[1], [0], [0], [1], [0, 0, 1, 1], [], []>} : vector<8x9xf32>, vector<9x128xf32>, vector<8x128xf32> -> vector<8x128xf32>
    %c0_3 = arith.constant 0 : index
    %c0_4 = arith.constant 0 : index
    %3 = vector.load %arg3[%c0_3, %c0_4] : memref<1x128xf32, #tpu.memory_space<vmem>>, vector<1x128xf32>
    %4 = vector.broadcast %3 : vector<1x128xf32> to vector<8x128xf32>
    %5 = arith.addf %2, %4 : vector<8x128xf32>
    %cst_5 = arith.constant 0.00999999977 : f32
    %6 = vector.broadcast %cst_5 : f32 to vector<8x128xf32>
    %7 = arith.mulf %6, %5 : vector<8x128xf32>
    %8 = arith.maximumf %5, %7 : vector<8x128xf32>
    %c0_6 = arith.constant 0 : index
    %c0_7 = arith.constant 0 : index
    %9 = vector.load %arg4[%c0_6, %c0_7] : memref<128x128xf32, #tpu.memory_space<vmem>>, vector<128x128xf32>
    %cst_8 = arith.constant dense<0.000000e+00> : vector<8x128xf32>
    %10 = tpu.matmul %8, %9, %cst_8 {dimension_numbers = #tpu.dot_dimension_numbers<[1], [0], [0], [1], [0, 0, 1, 1], [], []>} : vector<8x128xf32>, vector<128x128xf32>, vector<8x128xf32> -> vector<8x128xf32>
    %c0_9 = arith.constant 0 : index
    %c0_10 = arith.constant 0 : index
    %11 = vector.load %arg5[%c0_9, %c0_10] : memref<1x128xf32, #tpu.memory_space<vmem>>, vector<1x128xf32>
    %12 = vector.broadcast %11 : vector<1x128xf32> to vector<8x128xf32>
    %13 = arith.addf %10, %12 : vector<8x128xf32>
    %cst_11 = arith.constant 0.00999999977 : f32
    %14 = vector.broadcast %cst_11 : f32 to vector<8x128xf32>
    %15 = arith.mulf %14, %13 : vector<8x128xf32>
    %16 = arith.maximumf %13, %15 : vector<8x128xf32>
    %c0_12 = arith.constant 0 : index
    %c0_13 = arith.constant 0 : index
    %17 = vector.load %arg6[%c0_12, %c0_13] : memref<128x128xf32, #tpu.memory_space<vmem>>, vector<128x128xf32>
    %cst_14 = arith.constant dense<0.000000e+00> : vector<8x128xf32>
    %18 = tpu.matmul %16, %17, %cst_14 {dimension_numbers = #tpu.dot_dimension_numbers<[1], [0], [0], [1], [0, 0, 1, 1], [], []>} : vector<8x128xf32>, vector<128x128xf32>, vector<8x128xf32> -> vector<8x128xf32>
    %c0_15 = arith.constant 0 : index
    %c0_16 = arith.constant 0 : index
    %19 = vector.load %arg7[%c0_15, %c0_16] : memref<1x128xf32, #tpu.memory_space<vmem>>, vector<1x128xf32>
    %20 = vector.broadcast %19 : vector<1x128xf32> to vector<8x128xf32>
    %21 = arith.addf %18, %20 : vector<8x128xf32>
    %cst_17 = arith.constant 0.00999999977 : f32
    %22 = vector.broadcast %cst_17 : f32 to vector<8x128xf32>
    %23 = arith.mulf %22, %21 : vector<8x128xf32>
    %24 = arith.maximumf %21, %23 : vector<8x128xf32>
    %c0_18 = arith.constant 0 : index
    %c0_19 = arith.constant 0 : index
    %25 = vector.load %arg8[%c0_18, %c0_19] : memref<128x8xf32, #tpu.memory_space<vmem>>, vector<128x8xf32>
    %cst_20 = arith.constant dense<0.000000e+00> : vector<8x8xf32>
    %26 = tpu.matmul %24, %25, %cst_20 {dimension_numbers = #tpu.dot_dimension_numbers<[1], [0], [0], [1], [0, 0, 1, 1], [], []>} : vector<8x128xf32>, vector<128x8xf32>, vector<8x8xf32> -> vector<8x8xf32>
    %c0_21 = arith.constant 0 : index
    %c0_22 = arith.constant 0 : index
    %27 = vector.load %arg9[%c0_21, %c0_22] : memref<1x8xf32, #tpu.memory_space<vmem>>, vector<1x8xf32>
    %28 = vector.broadcast %27 : vector<1x8xf32> to vector<8x8xf32>
    %29 = arith.addf %26, %28 : vector<8x8xf32>
    %cst_23 = arith.constant 0.00999999977 : f32
    %30 = vector.broadcast %cst_23 : f32 to vector<8x8xf32>
    %31 = arith.mulf %30, %29 : vector<8x8xf32>
    %32 = arith.maximumf %29, %31 : vector<8x8xf32>
    %c0_24 = arith.constant 0 : index
    %c0_25 = arith.constant 0 : index
    %33 = vector.load %arg10[%c0_24, %c0_25] : memref<8x8xf32, #tpu.memory_space<vmem>>, vector<8x8xf32>
    tpu.vector_store %arg10[%c0_24, %c0_25], %32 {strides = array<i32>} : memref<8x8xf32, #tpu.memory_space<vmem>>, vector<8x8xf32>,
    return
  }
  func.func @transform_0(%arg0: i32) -> (i32, i32) {
    %c0_i32 = arith.constant 0 : i32
    %c0_i32_0 = arith.constant 0 : i32
    return %arg0, %c0_i32 : i32, i32
  }
  func.func @transform_1(%arg0: i32) -> (i32, i32) {
    %c0_i32 = arith.constant 0 : i32
    %c0_i32_0 = arith.constant 0 : i32
    %c0_i32_1 = arith.constant 0 : i32
    return %c0_i32, %c0_i32_0 : i32, i32
  }
  func.func @transform_2(%arg0: i32) -> (i32, i32) {
    %c0_i32 = arith.constant 0 : i32
    %c0_i32_0 = arith.constant 0 : i32
    %c0_i32_1 = arith.constant 0 : i32
    return %c0_i32, %c0_i32_0 : i32, i32
  }
  func.func @transform_3(%arg0: i32) -> (i32, i32) {
    %c0_i32 = arith.constant 0 : i32
    %c0_i32_0 = arith.constant 0 : i32
    %c0_i32_1 = arith.constant 0 : i32
    return %c0_i32, %c0_i32_0 : i32, i32
  }
  func.func @transform_4(%arg0: i32) -> (i32, i32) {
    %c0_i32 = arith.constant 0 : i32
    %c0_i32_0 = arith.constant 0 : i32
    %c0_i32_1 = arith.constant 0 : i32
    return %c0_i32, %c0_i32_0 : i32, i32
  }
  func.func @transform_5(%arg0: i32) -> (i32, i32) {
    %c0_i32 = arith.constant 0 : i32
    %c0_i32_0 = arith.constant 0 : i32
    %c0_i32_1 = arith.constant 0 : i32
    return %c0_i32, %c0_i32_0 : i32, i32
  }
  func.func @transform_6(%arg0: i32) -> (i32, i32) {
    %c0_i32 = arith.constant 0 : i32
    %c0_i32_0 = arith.constant 0 : i32
    %c0_i32_1 = arith.constant 0 : i32
    return %c0_i32, %c0_i32_0 : i32, i32
  }
  func.func @transform_7(%arg0: i32) -> (i32, i32) {
    %c0_i32 = arith.constant 0 : i32
    %c0_i32_0 = arith.constant 0 : i32
    %c0_i32_1 = arith.constant 0 : i32
    return %c0_i32, %c0_i32_0 : i32, i32
  }
  func.func @transform_8(%arg0: i32) -> (i32, i32) {
    %c0_i32 = arith.constant 0 : i32
    %c0_i32_0 = arith.constant 0 : i32
    %c0_i32_1 = arith.constant 0 : i32
    return %c0_i32, %c0_i32_0 : i32, i32
  }
  func.func @transform_9(%arg0: i32) -> (i32, i32) {
    %c0_i32 = arith.constant 0 : i32
    %c0_i32_0 = arith.constant 0 : i32
    return %arg0, %c0_i32 : i32, i32
  }
}

</mosaic_0001>

<llo_original>
// kernel: tpu_custom_call.1
$region0: #{tpu_custom_call.1}
  #allocation0 [shape = 'u32[]', space=smem, size = 0x4, offset = 0x4, fixed_abs, tag = 'smem constant byte address 0x4 - core index']
  #allocation1 [shape = 'u32[144,128]{1,0:T(1,128)}', space=vmem, size = 0x12000, scoped, tag = 'internal scratch']
  %s0 = inlined_call_operand.vmem [shape: f32[8,9], index: 0, kind: input, shape index: {}]
  %s1 = inlined_call_operand.hbm [shape: f32[9,128], index: 1, kind: input, shape index: {}]
  %s2 = inlined_call_operand.vmem [shape: f32[1,128], index: 2, kind: input, shape index: {}]
  %s3 = inlined_call_operand.vmem [shape: f32[128,128], index: 3, kind: input, shape index: {}]
  %s4 = inlined_call_operand.vmem [shape: f32[1,128], index: 4, kind: input, shape index: {}]
  %s5 = inlined_call_operand.hbm [shape: f32[128,128], index: 5, kind: input, shape index: {}]
  %s6 = inlined_call_operand.vmem [shape: f32[1,128], index: 6, kind: input, shape index: {}]
  %s7 = inlined_call_operand.vmem [shape: f32[128,8], index: 7, kind: input, shape index: {}]
  %s8 = inlined_call_operand.vmem [shape: f32[1,8], index: 8, kind: input, shape index: {}]
  %s9 = inlined_call_operand.hbm [shape: f32[8,8], index: 9, kind: output, shape index: {}]
  %s10 = sld [smem:[#allocation0]]
  $region54: #{tpu_custom_call.1} parent=0
    _
  %s12 = ssub.s32 1, %s10
  %s13 = scalar_select 0, %s12, %s10
  $region1: #{tpu_custom_call.1} parent=0
    #allocation2 [shape = 'u8[8192]{0}', space=vmem, size = 0x2000, scoped, tag = 'input window, operand 1, single buffered']
    #allocation3 [shape = 's32[1]{0}', space=sflag, size = 0x4, scoped, tag = 'scoped memory for tpu_custom_call.1']
    #allocation4 [shape = 's32[1]{0}', space=sflag, size = 0x4, scoped, tag = 'scoped memory for tpu_custom_call.1']
    #allocation5 [shape = 'u8[65536]{0}', space=vmem, size = 0x10000, scoped, tag = 'input window, operand 5, single buffered']
    #allocation6 [shape = 's32[1]{0}', space=sflag, size = 0x4, scoped, tag = 'scoped memory for tpu_custom_call.1']
    #allocation7 [shape = 'u8[4096]{0}', space=vmem, size = 0x1000, scoped, tag = 'output window, operand 0, single buffered']
    %14 = vsyncpa [#allocation3], 0
    %15 = vsyncpa [#allocation6], 0
    %16 = vsyncpa [#allocation4], 0
    // Predicated region
    $region2: #{tpu_custom_call.1} parent=1 // pred_check
      _
    $region3: #{tpu_custom_call.1} parent=1 // pred_check_branch
      %18 = sbr.rel (0) target = $region5
    $region4: #{tpu_custom_call.1} parent=1 // pred_region
      _
    $region5: #{tpu_custom_call.1} parent=1 // pred_fallthru
      _
    // Predicated region
    $region6: #{tpu_custom_call.1} parent=1 // pred_check
      _
    $region7: #{tpu_custom_call.1} parent=1 // pred_check_branch
      %20 = sbr.rel (0) target = $region9
    $region8: #{tpu_custom_call.1} parent=1 // pred_region
      %s22 = ssub.s32 256, 256
      %23 = vsyncadd [#allocation3], %s22
      %s24 = sshll.u32 [#allocation2], 4
      %s25 = int_to_ptr.vmem [resolvable:$true] %s24
      %30 = dma.hbm_to_vmem [thread:$0]  %s1, 256, %s25, [#allocation3], 128, 128, 8
    $region9: #{tpu_custom_call.1} parent=1 // pred_fallthru
      _
    // Predicated region
    $region10: #{tpu_custom_call.1} parent=1 // pred_check
      _
    $region11: #{tpu_custom_call.1} parent=1 // pred_check_branch
      %32 = sbr.rel (0) target = $region13
    $region12: #{tpu_custom_call.1} parent=1 // pred_region
      _
    $region13: #{tpu_custom_call.1} parent=1 // pred_fallthru
      _
    // Predicated region
    $region14: #{tpu_custom_call.1} parent=1 // pred_check
      _
    $region15: #{tpu_custom_call.1} parent=1 // pred_check_branch
      %34 = sbr.rel (0) target = $region17
    $region16: #{tpu_custom_call.1} parent=1 // pred_region
      _
    $region17: #{tpu_custom_call.1} parent=1 // pred_fallthru
      _
    // Predicated region
    $region18: #{tpu_custom_call.1} parent=1 // pred_check
      _
    $region19: #{tpu_custom_call.1} parent=1 // pred_check_branch
      %36 = sbr.rel (0) target = $region21
    $region20: #{tpu_custom_call.1} parent=1 // pred_region
      _
    $region21: #{tpu_custom_call.1} parent=1 // pred_fallthru
      _
    // Predicated region
    $region22: #{tpu_custom_call.1} parent=1 // pred_check
      _
    $region23: #{tpu_custom_call.1} parent=1 // pred_check_branch
      %38 = sbr.rel (0) target = $region25
    $region24: #{tpu_custom_call.1} parent=1 // pred_region
      %s40 = ssub.s32 2048, 2048
      %41 = vsyncadd [#allocation6], %s40
      %s42 = sshll.u32 [#allocation5], 4
      %s43 = int_to_ptr.vmem [resolvable:$true] %s42
      %48 = dma.hbm_to_vmem [thread:$0]  %s5, 2048, %s43, [#allocation6], 128, 128, 8
    $region25: #{tpu_custom_call.1} parent=1 // pred_fallthru
      _
    // Predicated region
    $region26: #{tpu_custom_call.1} parent=1 // pred_check
      _
    $region27: #{tpu_custom_call.1} parent=1 // pred_check_branch
      %50 = sbr.rel (0) target = $region29
    $region28: #{tpu_custom_call.1} parent=1 // pred_region
      _
    $region29: #{tpu_custom_call.1} parent=1 // pred_fallthru
      _
    // Predicated region
    $region30: #{tpu_custom_call.1} parent=1 // pred_check
      _
    $region31: #{tpu_custom_call.1} parent=1 // pred_check_branch
      %52 = sbr.rel (0) target = $region33
    $region32: #{tpu_custom_call.1} parent=1 // pred_region
      _
    $region33: #{tpu_custom_call.1} parent=1 // pred_fallthru
      _
    // Predicated region
    $region34: #{tpu_custom_call.1} parent=1 // pred_check
      _
    $region35: #{tpu_custom_call.1} parent=1 // pred_check_branch
      %54 = sbr.rel (0) target = $region37
    $region36: #{tpu_custom_call.1} parent=1 // pred_region
      _
    $region37: #{tpu_custom_call.1} parent=1 // pred_fallthru
      _
    // Predicated region
    $region38: #{tpu_custom_call.1} parent=1 // pred_check
      _
    $region39: #{tpu_custom_call.1} parent=1 // pred_check_branch
      %56 = sbr.rel (0) target = $region41
    $region40: #{tpu_custom_call.1} parent=1 // pred_region
      %57 = dma.done [#allocation3], 256
    $region41: #{tpu_custom_call.1} parent=1 // pred_fallthru
      _
    // Predicated region
    $region42: #{tpu_custom_call.1} parent=1 // pred_check
      _
    $region43: #{tpu_custom_call.1} parent=1 // pred_check_branch
      %59 = sbr.rel (0) target = $region45
    $region44: #{tpu_custom_call.1} parent=1 // pred_region
      %60 = dma.done [#allocation6], 2048
    $region45: #{tpu_custom_call.1} parent=1 // pred_fallthru
      _
    %v61 = vld [vmem:[%s0] sm:$0xff]
    %v62 = vld [vmem:[#allocation2] sm:$0xff]
    %v63 = vld [vmem:[#allocation2 + $0x8] sm:$0x1]
    %v64 = vld [vmem:[%s2] sm:$0x1]
    %v66 = vlaneseq
    %v67 = vshrl.u32 %v66, 7
    %v68 = vsub.s32 0, %v67
    %v69 = vrot.slane %v64, %v68
    %vm71 = vcmask 72704
    %v73 = vsel %vm71, %v61, 0
    %vm75 = vcmask 1040384
    %v77 = vsel %vm75, %v63, 0
    %79 = vmatprep.subr.mxu0 0.0
    %80 = vmatpush1.msra.mxu0 0.0
    %81 = vmatprep.subr.mxu0 0.0
    %82 = vmatpush1.msra.mxu0 0.0
    %83 = vmatprep.subr.mxu0 0.0
    %84 = vmatpush1.msra.mxu0 0.0
    %85 = vmatprep.subr.mxu0 0.0
    %86 = vmatpush1.msra.mxu0 0.0
    %87 = vmatprep.subr.mxu0 0.0
    %88 = vmatpush1.msra.mxu0 0.0
    %89 = vmatprep.subr.mxu0 0.0
    %90 = vmatpush1.msra.mxu0 0.0
    %91 = vmatprep.subr.mxu0 0.0
    %92 = vmatpush1.msra.mxu0 0.0
    %93 = vmatprep.subr.mxu0 0.0
    %94 = vmatpush1.msra.mxu0 0.0
    %95 = vmatprep.subr.mxu0 0.0
    %96 = vmatpush1.msra.mxu0 0.0
    %97 = vmatprep.subr.mxu0 0.0
    %98 = vmatpush1.msra.mxu0 0.0
    %99 = vmatprep.subr.mxu0 0.0
    %100 = vmatpush1.msra.mxu0 0.0
    %101 = vmatprep.subr.mxu0 0.0
    %102 = vmatpush1.msra.mxu0 0.0
    %103 = vmatprep.subr.mxu0 0.0
    %104 = vmatpush1.msra.mxu0 0.0
    %105 = vmatprep.subr.mxu0 0.0
    %106 = vmatpush1.msra.mxu0 0.0
    %107 = vmatprep.subr.mxu0 0.0
    %108 = vmatpush1.msra.mxu0 %v77
    %109 = vmatprep.subr.mxu0 0.0
    %110 = vmatpush1.msra.mxu0 %v62
    %111 = vmatprep.subr.mxu0 0.0
    %112 = vmatpush2.msra.mxu0 0.0
    %113 = vmatprep.subr.mxu0 0.0
    %114 = vmatpush2.msra.mxu0 0.0
    %115 = vmatprep.subr.mxu0 0.0
    %116 = vmatpush2.msra.mxu0 0.0
    %117 = vmatprep.subr.mxu0 0.0
    %118 = vmatpush2.msra.mxu0 0.0
    %119 = vmatprep.subr.mxu0 0.0
    %120 = vmatpush2.msra.mxu0 0.0
    %121 = vmatprep.subr.mxu0 0.0
    %122 = vmatpush2.msra.mxu0 0.0
    %123 = vmatprep.subr.mxu0 0.0
    %124 = vmatpush2.msra.mxu0 0.0
    %125 = vmatprep.subr.mxu0 0.0
    %126 = vmatpush2.msra.mxu0 0.0
    %127 = vmatprep.subr.mxu0 0.0
    %128 = vmatpush2.msra.mxu0 0.0
    %129 = vmatprep.subr.mxu0 0.0
    %130 = vmatpush2.msra.mxu0 0.0
    %131 = vmatprep.subr.mxu0 0.0
    %132 = vmatpush2.msra.mxu0 0.0
    %133 = vmatprep.subr.mxu0 0.0
    %134 = vmatpush2.msra.mxu0 0.0
    %135 = vmatprep.subr.mxu0 0.0
    %136 = vmatpush2.msra.mxu0 0.0
    %137 = vmatprep.subr.mxu0 0.0
    %138 = vmatpush2.msra.mxu0 0.0
    %139 = vmatprep.subr.mxu0 0.0
    %140 = vmatpush2.msra.mxu0 0.0
    %141 = vmatprep.subr.mxu0 0.0
    %142 = vmatpush2.msra.mxu0 0.0
    %143 = vmatprep.mubr.f32.mxu0 0.0
    %144 = vmatmul.mubr.f32.gmra.mxu0 %v73
    %v145 = vpop.f32.mrf.mxu0
    %v146 = vadd.f32 %v69, %v145
    %v147 = vpop.f32.mrf.mxu0
    %148 = vdwg.mxu0
    %v149 = vmul.f32 %v146, 0.01
    %v150 = vmax.f32 %v146, %v149
    %v151 = vld [vmem:[%s3] sm:$0xff]
    %v152 = vld [vmem:[%s3 + $0x8] sm:$0xff]
    %v153 = vld [vmem:[%s3 + $0x10] sm:$0xff]
    %v154 = vld [vmem:[%s3 + $0x18] sm:$0xff]
    %v155 = vld [vmem:[%s3 + $0x20] sm:$0xff]
    %v156 = vld [vmem:[%s3 + $0x28] sm:$0xff]
    %v157 = vld [vmem:[%s3 + $0x30] sm:$0xff]
    %v158 = vld [vmem:[%s3 + $0x38] sm:$0xff]
    %v159 = vld [vmem:[%s3 + $0x40] sm:$0xff]
    %v160 = vld [vmem:[%s3 + $0x48] sm:$0xff]
    %v161 = vld [vmem:[%s3 + $0x50] sm:$0xff]
    %v162 = vld [vmem:[%s3 + $0x58] sm:$0xff]
    %v163 = vld [vmem:[%s3 + $0x60] sm:$0xff]
    %v164 = vld [vmem:[%s3 + $0x68] sm:$0xff]
    %v165 = vld [vmem:[%s3 + $0x70] sm:$0xff]
    %v166 = vld [vmem:[%s3 + $0x78] sm:$0xff]
    %v167 = vld [vmem:[%s4] sm:$0x1]
    %v169 = vlaneseq
    %v170 = vshrl.u32 %v169, 7
    %v171 = vsub.s32 0, %v170
    %v172 = vrot.slane %v167, %v171
    %174 = vmatprep.subr.mxu0 0.0
    %175 = vmatpush1.msra.mxu0 %v166
    %176 = vmatprep.subr.mxu0 0.0
    %177 = vmatpush1.msra.mxu0 %v165
    %178 = vmatprep.subr.mxu0 0.0
    %179 = vmatpush1.msra.mxu0 %v164
    %180 = vmatprep.subr.mxu0 0.0
    %181 = vmatpush1.msra.mxu0 %v163
    %182 = vmatprep.subr.mxu0 0.0
    %183 = vmatpush1.msra.mxu0 %v162
    %184 = vmatprep.subr.mxu0 0.0
    %185 = vmatpush1.msra.mxu0 %v161
    %186 = vmatprep.subr.mxu0 0.0
    %187 = vmatpush1.msra.mxu0 %v160
    %188 = vmatprep.subr.mxu0 0.0
    %189 = vmatpush1.msra.mxu0 %v159
    %190 = vmatprep.subr.mxu0 0.0
    %191 = vmatpush1.msra.mxu0 %v158
    %192 = vmatprep.subr.mxu0 0.0
    %193 = vmatpush1.msra.mxu0 %v157
    %194 = vmatprep.subr.mxu0 0.0
    %195 = vmatpush1.msra.mxu0 %v156
    %196 = vmatprep.subr.mxu0 0.0
    %197 = vmatpush1.msra.mxu0 %v155
    %198 = vmatprep.subr.mxu0 0.0
    %199 = vmatpush1.msra.mxu0 %v154
    %200 = vmatprep.subr.mxu0 0.0
    %201 = vmatpush1.msra.mxu0 %v153
    %202 = vmatprep.subr.mxu0 0.0
    %203 = vmatpush1.msra.mxu0 %v152
    %204 = vmatprep.subr.mxu0 0.0
    %205 = vmatpush1.msra.mxu0 %v151
    %206 = vmatprep.subr.mxu0 0.0
    %207 = vmatpush2.msra.mxu0 0.0
    %208 = vmatprep.subr.mxu0 0.0
    %209 = vmatpush2.msra.mxu0 0.0
    %210 = vmatprep.subr.mxu0 0.0
    %211 = vmatpush2.msra.mxu0 0.0
    %212 = vmatprep.subr.mxu0 0.0
    %213 = vmatpush2.msra.mxu0 0.0
    %214 = vmatprep.subr.mxu0 0.0
    %215 = vmatpush2.msra.mxu0 0.0
    %216 = vmatprep.subr.mxu0 0.0
    %217 = vmatpush2.msra.mxu0 0.0
    %218 = vmatprep.subr.mxu0 0.0
    %219 = vmatpush2.msra.mxu0 0.0
    %220 = vmatprep.subr.mxu0 0.0
    %221 = vmatpush2.msra.mxu0 0.0
    %222 = vmatprep.subr.mxu0 0.0
    %223 = vmatpush2.msra.mxu0 0.0
    %224 = vmatprep.subr.mxu0 0.0
    %225 = vmatpush2.msra.mxu0 0.0
    %226 = vmatprep.subr.mxu0 0.0
    %227 = vmatpush2.msra.mxu0 0.0
    %228 = vmatprep.subr.mxu0 0.0
    %229 = vmatpush2.msra.mxu0 0.0
    %230 = vmatprep.subr.mxu0 0.0
    %231 = vmatpush2.msra.mxu0 0.0
    %232 = vmatprep.subr.mxu0 0.0
    %233 = vmatpush2.msra.mxu0 0.0
    %234 = vmatprep.subr.mxu0 0.0
    %235 = vmatpush2.msra.mxu0 0.0
    %236 = vmatprep.subr.mxu0 0.0
    %237 = vmatpush2.msra.mxu0 0.0
    %238 = vmatprep.mubr.f32.mxu0 0.0
    %239 = vmatmul.mubr.f32.gmra.mxu0 %v150
    %v240 = vpop.f32.mrf.mxu0
    %v241 = vadd.f32 %v172, %v240
    %v242 = vpop.f32.mrf.mxu0
    %243 = vdwg.mxu0
    %v244 = vmul.f32 %v241, 0.01
    %v245 = vmax.f32 %v241, %v244
    %v246 = vld [vmem:[#allocation5] sm:$0xff]
    %v247 = vld [vmem:[#allocation5 + $0x8] sm:$0xff]
    %v248 = vld [vmem:[#allocation5 + $0x10] sm:$0xff]
    %v249 = vld [vmem:[#allocation5 + $0x18] sm:$0xff]
    %v250 = vld [vmem:[#allocation5 + $0x20] sm:$0xff]
    %v251 = vld [vmem:[#allocation5 + $0x28] sm:$0xff]
    %v252 = vld [vmem:[#allocation5 + $0x30] sm:$0xff]
    %v253 = vld [vmem:[#allocation5 + $0x38] sm:$0xff]
    %v254 = vld [vmem:[#allocation5 + $0x40] sm:$0xff]
    %v255 = vld [vmem:[#allocation5 + $0x48] sm:$0xff]
    %v256 = vld [vmem:[#allocation5 + $0x50] sm:$0xff]
    %v257 = vld [vmem:[#allocation5 + $0x58] sm:$0xff]
    %v258 = vld [vmem:[#allocation5 + $0x60] sm:$0xff]
    %v259 = vld [vmem:[#allocation5 + $0x68] sm:$0xff]
    %v260 = vld [vmem:[#allocation5 + $0x70] sm:$0xff]
    %v261 = vld [vmem:[#allocation5 + $0x78] sm:$0xff]
    %v262 = vld [vmem:[%s6] sm:$0x1]
    %v264 = vlaneseq
    %v265 = vshrl.u32 %v264, 7
    %v266 = vsub.s32 0, %v265
    %v267 = vrot.slane %v262, %v266
    %269 = vmatprep.subr.mxu0 0.0
    %270 = vmatpush1.msra.mxu0 %v261
    %271 = vmatprep.subr.mxu0 0.0
    %272 = vmatpush1.msra.mxu0 %v260
    %273 = vmatprep.subr.mxu0 0.0
    %274 = vmatpush1.msra.mxu0 %v259
    %275 = vmatprep.subr.mxu0 0.0
    %276 = vmatpush1.msra.mxu0 %v258
    %277 = vmatprep.subr.mxu0 0.0
    %278 = vmatpush1.msra.mxu0 %v257
    %279 = vmatprep.subr.mxu0 0.0
    %280 = vmatpush1.msra.mxu0 %v256
    %281 = vmatprep.subr.mxu0 0.0
    %282 = vmatpush1.msra.mxu0 %v255
    %283 = vmatprep.subr.mxu0 0.0
    %284 = vmatpush1.msra.mxu0 %v254
    %285 = vmatprep.subr.mxu0 0.0
    %286 = vmatpush1.msra.mxu0 %v253
    %287 = vmatprep.subr.mxu0 0.0
    %288 = vmatpush1.msra.mxu0 %v252
    %289 = vmatprep.subr.mxu0 0.0
    %290 = vmatpush1.msra.mxu0 %v251
    %291 = vmatprep.subr.mxu0 0.0
    %292 = vmatpush1.msra.mxu0 %v250
    %293 = vmatprep.subr.mxu0 0.0
    %294 = vmatpush1.msra.mxu0 %v249
    %295 = vmatprep.subr.mxu0 0.0
    %296 = vmatpush1.msra.mxu0 %v248
    %297 = vmatprep.subr.mxu0 0.0
    %298 = vmatpush1.msra.mxu0 %v247
    %299 = vmatprep.subr.mxu0 0.0
    %300 = vmatpush1.msra.mxu0 %v246
    %301 = vmatprep.subr.mxu0 0.0
    %302 = vmatpush2.msra.mxu0 0.0
    %303 = vmatprep.subr.mxu0 0.0
    %304 = vmatpush2.msra.mxu0 0.0
    %305 = vmatprep.subr.mxu0 0.0
    %306 = vmatpush2.msra.mxu0 0.0
    %307 = vmatprep.subr.mxu0 0.0
    %308 = vmatpush2.msra.mxu0 0.0
    %309 = vmatprep.subr.mxu0 0.0
    %310 = vmatpush2.msra.mxu0 0.0
    %311 = vmatprep.subr.mxu0 0.0
    %312 = vmatpush2.msra.mxu0 0.0
    %313 = vmatprep.subr.mxu0 0.0
    %314 = vmatpush2.msra.mxu0 0.0
    %315 = vmatprep.subr.mxu0 0.0
    %316 = vmatpush2.msra.mxu0 0.0
    %317 = vmatprep.subr.mxu0 0.0
    %318 = vmatpush2.msra.mxu0 0.0
    %319 = vmatprep.subr.mxu0 0.0
    %320 = vmatpush2.msra.mxu0 0.0
    %321 = vmatprep.subr.mxu0 0.0
    %322 = vmatpush2.msra.mxu0 0.0
    %323 = vmatprep.subr.mxu0 0.0
    %324 = vmatpush2.msra.mxu0 0.0
    %325 = vmatprep.subr.mxu0 0.0
    %326 = vmatpush2.msra.mxu0 0.0
    %327 = vmatprep.subr.mxu0 0.0
    %328 = vmatpush2.msra.mxu0 0.0
    %329 = vmatprep.subr.mxu0 0.0
    %330 = vmatpush2.msra.mxu0 0.0
    %331 = vmatprep.subr.mxu0 0.0
    %332 = vmatpush2.msra.mxu0 0.0
    %333 = vmatprep.mubr.f32.mxu0 0.0
    %334 = vmatmul.mubr.f32.gmra.mxu0 %v245
    %v335 = vpop.f32.mrf.mxu0
    %v336 = vadd.f32 %v267, %v335
    %v337 = vpop.f32.mrf.mxu0
    %338 = vdwg.mxu0
    %v339 = vmul.f32 %v336, 0.01
    %v340 = vmax.f32 %v336, %v339
    %v341 = vld [vmem:[%s7] sm:$0xff]
    %v342 = vld [vmem:[%s7 + $0x8] sm:$0xff]
    %v343 = vld [vmem:[%s7 + $0x10] sm:$0xff]
    %v344 = vld [vmem:[%s7 + $0x18] sm:$0xff]
    %v345 = vld [vmem:[%s7 + $0x20] sm:$0xff]
    %v346 = vld [vmem:[%s7 + $0x28] sm:$0xff]
    %v347 = vld [vmem:[%s7 + $0x30] sm:$0xff]
    %v348 = vld [vmem:[%s7 + $0x38] sm:$0xff]
    %v349 = vld [vmem:[%s7 + $0x40] sm:$0xff]
    %v350 = vld [vmem:[%s7 + $0x48] sm:$0xff]
    %v351 = vld [vmem:[%s7 + $0x50] sm:$0xff]
    %v352 = vld [vmem:[%s7 + $0x58] sm:$0xff]
    %v353 = vld [vmem:[%s7 + $0x60] sm:$0xff]
    %v354 = vld [vmem:[%s7 + $0x68] sm:$0xff]
    %v355 = vld [vmem:[%s7 + $0x70] sm:$0xff]
    %v356 = vld [vmem:[%s7 + $0x78] sm:$0xff]
    %v357 = vld [vmem:[%s8] sm:$0x1]
    %v359 = vlaneseq
    %v360 = vshrl.u32 %v359, 7
    %v361 = vsub.s32 0, %v360
    %v362 = vrot.slane %v357, %v361
    %364 = vmatprep.subr.mxu0 0.0
    %365 = vmatpush1.msra.mxu0 %v356
    %366 = vmatprep.subr.mxu0 0.0
    %367 = vmatpush1.msra.mxu0 %v355
    %368 = vmatprep.subr.mxu0 0.0
    %369 = vmatpush1.msra.mxu0 %v354
    %370 = vmatprep.subr.mxu0 0.0
    %371 = vmatpush1.msra.mxu0 %v353
    %372 = vmatprep.subr.mxu0 0.0
    %373 = vmatpush1.msra.mxu0 %v352
    %374 = vmatprep.subr.mxu0 0.0
    %375 = vmatpush1.msra.mxu0 %v351
    %376 = vmatprep.subr.mxu0 0.0
    %377 = vmatpush1.msra.mxu0 %v350
    %378 = vmatprep.subr.mxu0 0.0
    %379 = vmatpush1.msra.mxu0 %v349
    %380 = vmatprep.subr.mxu0 0.0
    %381 = vmatpush1.msra.mxu0 %v348
    %382 = vmatprep.subr.mxu0 0.0
    %383 = vmatpush1.msra.mxu0 %v347
    %384 = vmatprep.subr.mxu0 0.0
    %385 = vmatpush1.msra.mxu0 %v346
    %386 = vmatprep.subr.mxu0 0.0
    %387 = vmatpush1.msra.mxu0 %v345
    %388 = vmatprep.subr.mxu0 0.0
    %389 = vmatpush1.msra.mxu0 %v344
    %390 = vmatprep.subr.mxu0 0.0
    %391 = vmatpush1.msra.mxu0 %v343
    %392 = vmatprep.subr.mxu0 0.0
    %393 = vmatpush1.msra.mxu0 %v342
    %394 = vmatprep.subr.mxu0 0.0
    %395 = vmatpush1.msra.mxu0 %v341
    %396 = vmatprep.subr.mxu0 0.0
    %397 = vmatpush2.msra.mxu0 0.0
    %398 = vmatprep.subr.mxu0 0.0
    %399 = vmatpush2.msra.mxu0 0.0
    %400 = vmatprep.subr.mxu0 0.0
    %401 = vmatpush2.msra.mxu0 0.0
    %402 = vmatprep.subr.mxu0 0.0
    %403 = vmatpush2.msra.mxu0 0.0
    %404 = vmatprep.subr.mxu0 0.0
    %405 = vmatpush2.msra.mxu0 0.0
    %406 = vmatprep.subr.mxu0 0.0
    %407 = vmatpush2.msra.mxu0 0.0
    %408 = vmatprep.subr.mxu0 0.0
    %409 = vmatpush2.msra.mxu0 0.0
    %410 = vmatprep.subr.mxu0 0.0
    %411 = vmatpush2.msra.mxu0 0.0
    %412 = vmatprep.subr.mxu0 0.0
    %413 = vmatpush2.msra.mxu0 0.0
    %414 = vmatprep.subr.mxu0 0.0
    %415 = vmatpush2.msra.mxu0 0.0
    %416 = vmatprep.subr.mxu0 0.0
    %417 = vmatpush2.msra.mxu0 0.0
    %418 = vmatprep.subr.mxu0 0.0
    %419 = vmatpush2.msra.mxu0 0.0
    %420 = vmatprep.subr.mxu0 0.0
    %421 = vmatpush2.msra.mxu0 0.0
    %422 = vmatprep.subr.mxu0 0.0
    %423 = vmatpush2.msra.mxu0 0.0
    %424 = vmatprep.subr.mxu0 0.0
    %425 = vmatpush2.msra.mxu0 0.0
    %426 = vmatprep.subr.mxu0 0.0
    %427 = vmatpush2.msra.mxu0 0.0
    %428 = vmatprep.mubr.f32.mxu0 0.0
    %429 = vmatmul.mubr.f32.gmra.mxu0 %v340
    %v430 = vpop.f32.mrf.mxu0
    %v431 = vadd.f32 %v362, %v430
    %v432 = vpop.f32.mrf.mxu0
    %433 = vdwg.mxu0
    %v434 = vmul.f32 %v431, 0.01
    %v435 = vmax.f32 %v431, %v434
    %vm436 = vcmask 64512
    %437 = vst.msk [vmem:[#allocation7] sm:$0xff] %vm436, %v435
    // Predicated region
    $region46: #{tpu_custom_call.1} parent=1 // pred_check
      _
    $region47: #{tpu_custom_call.1} parent=1 // pred_check_branch
      %439 = sbr.rel (0) target = $region49
    $region48: #{tpu_custom_call.1} parent=1 // pred_region
      %s441 = ssub.s32 128, 128
      %442 = vsyncadd [#allocation4], %s441
      %s444 = sshll.u32 [#allocation7], 4
      %s445 = int_to_ptr.vmem [resolvable:$true] %s444
      %447 = dma.vmem_to_hbm [thread:$0]  %s445, 128, %s9, [#allocation4]
    $region49: #{tpu_custom_call.1} parent=1 // pred_fallthru
      _
    // Predicated region
    $region50: #{tpu_custom_call.1} parent=1 // pred_check
      _
    $region51: #{tpu_custom_call.1} parent=1 // pred_check_branch
      %449 = sbr.rel (0) target = $region53
    $region52: #{tpu_custom_call.1} parent=1 // pred_region
      %450 = dma.done [#allocation4], 128
    $region53: #{tpu_custom_call.1} parent=1 // pred_fallthru
      _
    %451 = vsyncpa [#allocation3], 1
    %452 = vsyncpa [#allocation6], 1
    %453 = vsyncpa [#allocation4], 1

</llo_original>
